<compile_context>
chip_gen: v5e
topology: v5e:2x2
jax: 0.10.0
libtpu: 0.0.40
codegen_flags: <defaults>
</compile_context>

<pallas_src>
import numpy as np
import jax
import jax.numpy as jnp
from jax import lax
from jax.experimental import pallas as pl
from jax.experimental.pallas import tpu as pltpu


_VMEM = pl.BlockSpec(memory_space=pltpu.MemorySpace.VMEM)


# -----------------------------------------------------------------------------
# Fused Pallas kernel: combined fwd+bwd LSTM recurrence + MLP head epilogue
# -----------------------------------------------------------------------------
def _make_fused_kernel(T, B, H, T_a, T_b, num_layers):
    """Build the fused forward kernel for static (T, B, H, T_a, T_b, layers).

    Batch-row layout: rows [0:B] = premise group (length T_a), rows [B:2B] =
    hypothesis group (length T_b).  The forward and backward LSTM directions
    are fused along the feature axis: states are [h_fwd | h_bwd] of width 2H,
    and gate columns are pre-combined on the host to
    [i_f,i_b | f_f,f_b | o_f,o_b | g_f,g_b]  (width 8H).
    """
    twoB = 2 * B
    H2 = 2 * H          # combined (fwd|bwd) hidden width

    def kernel(*refs):
        x_ref = refs[0]                       # (T*2B, 2*D_in) combined input
        idx = 1
        layer_refs = []
        for _ in range(num_layers):
            layer_refs.append(refs[idx:idx + 3])      # (wih_comb, whh_comb, bias_comb)
            idx += 3
        w1_ref, b1_ref, w2_ref, b2_ref = refs[idx:idx + 4]
        out_ref = refs[idx + 4]

        # Static row-id plane (only needed when the two groups have different
        # padded lengths): used to freeze the shorter group's rows once its
        # sequence has ended, matching torch's per-call c_n.
        if T_a != T_b:
            row = lax.broadcasted_iota(jnp.int32, (twoB, H2), 0)

        inp = x_ref[...]                      # time-major, rows [prem|hyp]

        c = None
        for l in range(num_layers):
            wih_ref, whh_ref, bias_ref = layer_refs[l]
            whh = whh_ref[...]                # (2H, 8H) block-diagonal

            # Hoisted input projection: ONE MXU matmul covering every timestep
            # and BOTH directions, with the fused bias folded in.
            gx = jnp.dot(inp, wih_ref[...],
                         preferred_element_type=jnp.float32) + bias_ref[...]

            h = jnp.zeros((twoB, H2), jnp.float32)
            c = jnp.zeros((twoB, H2), jnp.float32)
            hs = []

            # Fully unrolled recurrence (T static & small): the scheduler can
            # overlap MXU pops, EUP sigmoid/tanh and VPU gate math across steps.
            for t in range(T):
                gates = gx[t * twoB:(t + 1) * twoB, :] + jnp.dot(
                    h, whh, preferred_element_type=jnp.float32)
                sig = jax.nn.sigmoid(gates[:, :3 * H2])   # i | f | o (both dirs)
                g = jnp.tanh(gates[:, 3 * H2:])           # g       (both dirs)
                c_new = sig[:, H2:2 * H2] * c + sig[:, :H2] * g
                h_new = sig[:, 2 * H2:3 * H2] * jnp.tanh(c_new)

                if t < T_a and t < T_b:       # both groups still running
                    h, c = h_new, c_new
                else:
                    # Exactly one group has ended: freeze its rows so the final
                    # c matches torch's c_n at that group's own padded length.
                    mask = (row < B) if t < T_a else (row >= B)
                    h = jnp.where(mask, h_new, h)
                    c = jnp.where(mask, c_new, c)

                if l + 1 < num_layers:
                    hs.append(h)

            if l + 1 < num_layers:
                # Next layer's input stays in VMEM values; the hidden-state
                # sequence is never written back to HBM.  The [h_f|h_b] layout
                # is exactly the combined-input layout the next layer expects.
                inp = jnp.concatenate(hs, axis=0)

        # c rows: [:B] = premise [c_f|c_b], [B:] = hypothesis [c_f|c_b]
        # -> torch.cat((a, a_r, b, b_r), dim=1)
        ab = jnp.concatenate([c[:B], c[B:]], axis=1)          # (B, 4H)

        # int_layer -> ReLU -> out_layer, fused in the same kernel epilogue.
        h1 = jnp.dot(ab, w1_ref[...],
                     preferred_element_type=jnp.float32) + b1_ref[...]
        h1 = jnp.maximum(h1, 0.0)
        out = jnp.dot(h1, w2_ref[...],
                      preferred_element_type=jnp.float32) + b2_ref[...]
        out_ref[...] = out.astype(out_ref.dtype)

    return kernel


def _fused_forward_call(x_comb, layers, w1, b1, w2, b2,
                        T, B, H, T_a, T_b, num_classes):
    """One pallas_call for the full ShallowBiLSTM forward (LSTMs + MLP head)."""
    num_layers = len(layers)
    kernel = _make_fused_kernel(T, B, H, T_a, T_b, num_layers)
    flat_w = []
    for lw in layers:
        flat_w.extend(lw)           # (wih_comb, whh_comb, bias_comb)
    n_in = 1 + 3 * num_layers + 4
    # NOTE(v7x): the premise/hypothesis groups could be sharded across the two
    # TensorCores with a parallel grid axis, but that would split the fused
    # epilogue back into a second launch; at these sizes one launch wins.
    return pl.pallas_call(
        kernel,
        out_shape=jax.ShapeDtypeStruct((B, num_classes), jnp.float32),
        in_specs=[_VMEM] * n_in,
        out_specs=_VMEM,
    )(x_comb, *flat_w, w1, b1, w2, b2)


# -----------------------------------------------------------------------------
# Host-side glue: padding, parameter init and one-time kernel-layout prep
# -----------------------------------------------------------------------------
def fix_padding(batch_premises, batch_hypotheses):
    """Numpy equivalent of the torch fix_padding (pad_sequence, value 0)."""
    def pad(lists):
        maxlen = max(len(l) for l in lists)
        out = np.zeros((len(lists), maxlen), dtype=np.int32)
        for i, l in enumerate(lists):
            out[i, :len(l)] = np.asarray(l, dtype=np.int32)
        return out
    a = pad(batch_premises)
    a_r = pad([list(l)[::-1] for l in batch_premises])
    b = pad(batch_hypotheses)
    b_r = pad([list(l)[::-1] for l in batch_hypotheses])
    return a, b, a_r, b_r


def init_params(key, vocab_size, hidden_dim, num_layers, num_classes):
    """Parameters in PyTorch layout (w_ih (4H,in), w_hh (4H,H), gate order i,f,g,o)."""
    hd = hidden_dim // 2          # "self.hidden_dim" = embedding dim
    lh = hd // 2                  # LSTM hidden size
    keys = iter(jax.random.split(key, 8 + 8 * num_layers * 2))

    emb = 0.1 * jax.random.normal(next(keys), (vocab_size, hd), jnp.float32)
    emb = emb.at[0].set(0.0)      # padding_idx=0

    def lstm_stack():
        layers = []
        bound = 1.0 / np.sqrt(lh)
        for layer in range(num_layers):
            in_dim = hd if layer == 0 else lh
            layers.append(dict(
                w_ih=jax.random.uniform(next(keys), (4 * lh, in_dim),
                                        jnp.float32, -bound, bound),
                w_hh=jax.random.uniform(next(keys), (4 * lh, lh),
                                        jnp.float32, -bound, bound),
                b_ih=jax.random.uniform(next(keys), (4 * lh,),
                                        jnp.float32, -bound, bound),
                b_hh=jax.random.uniform(next(keys), (4 * lh,),
                                        jnp.float32, -bound, bound),
            ))
        return layers

    b1_bound = 1.0 / np.sqrt(2 * hd)
    b2_bound = 1.0 / np.sqrt(hd)
    return dict(
        embedding=emb,
        lstm_fwd=lstm_stack(),
        lstm_bwd=lstm_stack(),
        w1=jax.random.uniform(next(keys), (hd, 2 * hd), jnp.float32,
                              -b1_bound, b1_bound),
        b1=jax.random.uniform(next(keys), (hd,), jnp.float32,
                              -b1_bound, b1_bound),
        w2=jax.random.uniform(next(keys), (num_classes, hd), jnp.float32,
                              -b2_bound, b2_bound),
        b2=jax.random.uniform(next(keys), (num_classes,), jnp.float32,
                              -b2_bound, b2_bound),
    )


def _reorder_gates_rows(w):
    """Reorder PyTorch gate blocks [i,f,g,o] (along dim 0) to [i,f,o,g]."""
    H = w.shape[0] // 4
    return jnp.concatenate([w[:2 * H], w[3 * H:], w[2 * H:3 * H]], axis=0)


def _combine_dirs(mat_f, mat_b, H):
    """Block-diagonal fwd/bwd weight fusion with interleaved gate columns.

    mat_f: (Kf, 4H), mat_b: (Kb, 4H), gate column order [i, f, o, g].
    Returns (Kf+Kb, 8H) with columns [i_f,i_b | f_f,f_b | o_f,o_b | g_f,g_b]
    and rows [fwd-input features | bwd-input features].
    """
    Kf, Kb = mat_f.shape[0], mat_b.shape[0]
    zf = jnp.zeros((Kf, H), jnp.float32)
    zb = jnp.zeros((Kb, H), jnp.float32)
    cols = []
    for k in range(4):
        top = jnp.concatenate([mat_f[:, k * H:(k + 1) * H], zf], axis=1)
        bot = jnp.concatenate([zb, mat_b[:, k * H:(k + 1) * H]], axis=1)
        cols.append(jnp.concatenate([top, bot], axis=0))
    return jnp.concatenate(cols, axis=1)


def _combine_bias(b_f, b_b, H):
    """b_f, b_b: (1, 4H), gate order [i,f,o,g] -> (1, 8H) interleaved fwd/bwd."""
    cols = []
    for k in range(4):
        cols.append(b_f[:, k * H:(k + 1) * H])
        cols.append(b_b[:, k * H:(k + 1) * H])
    return jnp.concatenate(cols, axis=1)


def prepare_params(params):
    """One-time prep: gate reorder, transpose, fwd/bwd fusion, bias fusion."""
    def prep_dir(lyr):
        wih = _reorder_gates_rows(jnp.asarray(lyr["w_ih"], jnp.float32)).T
        whh = _reorder_gates_rows(jnp.asarray(lyr["w_hh"], jnp.float32)).T
        bias = _reorder_gates_rows(
            (jnp.asarray(lyr["b_ih"], jnp.float32)
             + jnp.asarray(lyr["b_hh"], jnp.float32))[:, None]).T     # (1, 4H)
        return wih, whh, bias

    layers = []
    for lf, lb in zip(params["lstm_fwd"], params["lstm_bwd"]):
        wih_f, whh_f, b_f = prep_dir(lf)
        wih_b, whh_b, b_b = prep_dir(lb)
        H = whh_f.shape[0]
        layers.append((_combine_dirs(wih_f, wih_b, H),
                       _combine_dirs(whh_f, whh_b, H),
                       _combine_bias(b_f, b_b, H)))

    return dict(
        embedding=jnp.asarray(params["embedding"], jnp.float32),
        layers=layers,
        w1=jnp.asarray(params["w1"], jnp.float32).T,
        b1=jnp.asarray(params["b1"], jnp.float32).reshape(1, -1),
        w2=jnp.asarray(params["w2"], jnp.float32).T,
        b2=jnp.asarray(params["b2"], jnp.float32).reshape(1, -1),
    )


# -----------------------------------------------------------------------------
# Jitted end-to-end forward
# -----------------------------------------------------------------------------
@jax.jit
def _forward_jit(prepared, tok_a, tok_b, tok_ar, tok_br):
    emb = prepared["embedding"]
    B, T_a = tok_a.shape
    _, T_b = tok_b.shape
    T = max(T_a, T_b)
    D = emb.shape[1]

    def embed_tm(tok):
        x = jnp.take(emb, tok, axis=0)            # (B, T_x, D)
        x = jnp.transpose(x, (1, 0, 2))           # (T_x, B, D) time-major
        pad = T - x.shape[0]
        if pad:
            x = jnp.pad(x, ((0, pad), (0, 0), (0, 0)))
        return x

    ea, eb = embed_tm(tok_a), embed_tm(tok_b)
    ear, ebr = embed_tm(tok_ar), embed_tm(tok_br)
    # Per timestep, rows = [premise batch | hypothesis batch]; fwd / bwd token
    # streams stacked along the feature axis to match the block-diagonal
    # combined W_ih; flattened time-major so the hoisted projection is one
    # plain matmul inside the kernel.
    x_fwd = jnp.concatenate([ea, eb], axis=1)                 # (T, 2B, D)
    x_bwd = jnp.concatenate([ear, ebr], axis=1)               # (T, 2B, D)
    x_comb = jnp.concatenate([x_fwd, x_bwd], axis=-1).reshape(T * 2 * B, 2 * D)

    H = prepared["layers"][0][1].shape[0] // 2
    num_classes = prepared["w2"].shape[1]

    return _fused_forward_call(x_comb, prepared["layers"],
                               prepared["w1"], prepared["b1"],
                               prepared["w2"], prepared["b2"],
                               T, B, H, T_a, T_b, num_classes)


def shallow_bilstm_forward(prepared, batch_premises, batch_hypotheses):
    # TODO(synk): if sequence lengths vary a lot across batches, bucket T_a/T_b
    # to a few fixed sizes on the host to avoid retracing/recompiling.
    a, b, a_r, b_r = fix_padding(batch_premises, batch_hypotheses)
    return _forward_jit(prepared,
                        jnp.asarray(a), jnp.asarray(b),
                        jnp.asarray(a_r), jnp.asarray(b_r))


# -----------------------------------------------------------------------------
# Pure-JAX reference (mirrors torch.nn.LSTM / Linear exactly) for validation
# -----------------------------------------------------------------------------
def _reference_forward(params, a, b, a_r, b_r):
    emb = jnp.asarray(params["embedding"])

    def run_lstm(tokens, layers):
        x = jnp.take(emb, jnp.asarray(tokens, jnp.int32), axis=0)  # (B, T, D)
        c = None
        for lyr in layers:
            wih, whh = jnp.asarray(lyr["w_ih"]), jnp.asarray(lyr["w_hh"])
            bias = jnp.asarray(lyr["b_ih"]) + jnp.asarray(lyr["b_hh"])
            H = whh.shape[1]
            Bx, Tx, _ = x.shape
            h = jnp.zeros((Bx, H), jnp.float32)
            c = jnp.zeros((Bx, H), jnp.float32)
            hs = []
            for t in range(Tx):
                g = x[:, t, :] @ wih.T + h @ whh.T + bias
                i = jax.nn.sigmoid(g[:, :H])
                f = jax.nn.sigmoid(g[:, H:2 * H])
                gg = jnp.tanh(g[:, 2 * H:3 * H])
                o = jax.nn.sigmoid(g[:, 3 * H:])
                c = f * c + i * gg
                h = o * jnp.tanh(c)
                hs.append(h)
            x = jnp.stack(hs, axis=1)
        return c

    ca = run_lstm(a, params["lstm_fwd"])
    cb = run_lstm(b, params["lstm_fwd"])
    car = run_lstm(a_r, params["lstm_bwd"])
    cbr = run_lstm(b_r, params["lstm_bwd"])
    ab = jnp.concatenate([ca, car, cb, cbr], axis=1)
    h1 = jnp.maximum(ab @ jnp.asarray(params["w1"]).T + params["b1"], 0.0)
    return h1 @ jnp.asarray(params["w2"]).T + params["b2"]


# -----------------------------------------------------------------------------
if __name__ == "__main__":
    vocab_size = 50
    hidden_dim = 32        # -> embedding dim 16, LSTM hidden 8
    num_layers = 1
    num_classes = 3

    key = jax.random.PRNGKey(0)
    pkey, dkey = jax.random.split(key)
    params = init_params(pkey, vocab_size, hidden_dim, num_layers, num_classes)
    prepared = prepare_params(params)

    # Deterministic variable-length token lists (batch of 2), ids in [1, vocab).
    tok = np.asarray(
        jax.random.randint(dkey, (4, 8), 1, vocab_size), dtype=np.int32)
    batch_premises = [list(tok[0, :8]), list(tok[1, :5])]
    batch_hypotheses = [list(tok[2, :6]), list(tok[3, :7])]

    logits = shallow_bilstm_forward(prepared, batch_premises, batch_hypotheses)
    logits = jax.block_until_ready(logits)
    assert logits.shape == (2, num_classes) and logits.dtype == jnp.float32

    # Validate against a pure-JAX reference of the PyTorch module (tolerance is
    # loose only to absorb TPU MXU default matmul-pass precision differences).
    a, b, a_r, b_r = fix_padding(batch_premises, batch_hypotheses)
    ref = jax.block_until_ready(_reference_forward(params, a, b, a_r, b_r))
    np.testing.assert_allclose(np.asarray(logits), np.asarray(ref),
                               rtol=2e-2, atol=2e-2)

    print("KERNEL_OK")
</pallas_src>

<mosaic_0001>
module attributes {stable_mosaic.version = 11 : i64} {
  func.func @kernel(%arg0: memref<32x32xf32, #tpu.memory_space<vmem>>, %arg1: memref<32x64xf32, #tpu.memory_space<vmem>>, %arg2: memref<16x64xf32, #tpu.memory_space<vmem>>, %arg3: memref<1x64xf32, #tpu.memory_space<vmem>>, %arg4: memref<32x16xf32, #tpu.memory_space<vmem>>, %arg5: memref<1x16xf32, #tpu.memory_space<vmem>>, %arg6: memref<16x3xf32, #tpu.memory_space<vmem>>, %arg7: memref<1x3xf32, #tpu.memory_space<vmem>>, %arg8: memref<2x3xf32, #tpu.memory_space<vmem>>) attributes {dimension_semantics = [], scalar_prefetch = 0 : i64, scratch_operands = 0 : i64, tpu.core_type = #tpu.core_type<tc>} {
    %0 = tpu.iota {dimensions = array<i32: 0>} : vector<4x16xi32>
    %c0 = arith.constant 0 : index
    %c0_0 = arith.constant 0 : index
    %1 = vector.load %arg0[%c0, %c0_0] : memref<32x32xf32, #tpu.memory_space<vmem>>, vector<32x32xf32>
    %c0_1 = arith.constant 0 : index
    %c0_2 = arith.constant 0 : index
    %2 = vector.load %arg2[%c0_1, %c0_2] : memref<16x64xf32, #tpu.memory_space<vmem>>, vector<16x64xf32>
    %c0_3 = arith.constant 0 : index
    %c0_4 = arith.constant 0 : index
    %3 = vector.load %arg1[%c0_3, %c0_4] : memref<32x64xf32, #tpu.memory_space<vmem>>, vector<32x64xf32>
    %cst = arith.constant dense<0.000000e+00> : vector<32x64xf32>
    %4 = tpu.matmul %1, %3, %cst {dimension_numbers = #tpu.dot_dimension_numbers<[1], [0], [0], [1], [0, 0, 1, 1], [], []>} : vector<32x32xf32>, vector<32x64xf32>, vector<32x64xf32> -> vector<32x64xf32>
    %c0_5 = arith.constant 0 : index
    %c0_6 = arith.constant 0 : index
    %5 = vector.load %arg3[%c0_5, %c0_6] : memref<1x64xf32, #tpu.memory_space<vmem>>, vector<1x64xf32>
    %6 = vector.broadcast %5 : vector<1x64xf32> to vector<32x64xf32>
    %7 = arith.addf %4, %6 : vector<32x64xf32>
    %cst_7 = arith.constant 0.000000e+00 : f32
    %8 = vector.broadcast %cst_7 : f32 to vector<4x16xf32>
    %cst_8 = arith.constant 0.000000e+00 : f32
    %9 = vector.broadcast %cst_8 : f32 to vector<4x16xf32>
    %10 = vector.extract_strided_slice %7 {offsets = [0, 0], sizes = [4, 64], strides = [1, 1]} : vector<32x64xf32> to vector<4x64xf32>
    %cst_9 = arith.constant dense<0.000000e+00> : vector<4x64xf32>
    %11 = tpu.matmul %8, %2, %cst_9 {dimension_numbers = #tpu.dot_dimension_numbers<[1], [0], [0], [1], [0, 0, 1, 1], [], []>} : vector<4x16xf32>, vector<16x64xf32>, vector<4x64xf32> -> vector<4x64xf32>
    %12 = arith.addf %10, %11 : vector<4x64xf32>
    %13 = vector.extract_strided_slice %12 {offsets = [0, 0], sizes = [4, 48], strides = [1, 1]} : vector<4x64xf32> to vector<4x48xf32>
    %14 = arith.negf %13 : vector<4x48xf32>
    %15 = math.exp %14 : vector<4x48xf32>
    %cst_10 = arith.constant 1.000000e+00 : f32
    %16 = vector.broadcast %cst_10 : f32 to vector<4x48xf32>
    %17 = arith.addf %16, %15 : vector<4x48xf32>
    %18 = arith.divf %16, %17 : vector<4x48xf32>
    %19 = vector.extract_strided_slice %12 {offsets = [0, 48], sizes = [4, 16], strides = [1, 1]} : vector<4x64xf32> to vector<4x16xf32>
    %20 = math.tanh %19 : vector<4x16xf32>
    %21 = vector.extract_strided_slice %18 {offsets = [0, 16], sizes = [4, 16], strides = [1, 1]} : vector<4x48xf32> to vector<4x16xf32>
    %22 = arith.mulf %21, %9 : vector<4x16xf32>
    %23 = vector.extract_strided_slice %18 {offsets = [0, 0], sizes = [4, 16], strides = [1, 1]} : vector<4x48xf32> to vector<4x16xf32>
    %24 = arith.mulf %23, %20 : vector<4x16xf32>
    %25 = arith.addf %22, %24 : vector<4x16xf32>
    %26 = vector.extract_strided_slice %18 {offsets = [0, 32], sizes = [4, 16], strides = [1, 1]} : vector<4x48xf32> to vector<4x16xf32>
    %27 = math.tanh %25 : vector<4x16xf32>
    %28 = arith.mulf %26, %27 : vector<4x16xf32>
    %29 = vector.extract_strided_slice %7 {offsets = [4, 0], sizes = [4, 64], strides = [1, 1]} : vector<32x64xf32> to vector<4x64xf32>
    %cst_11 = arith.constant dense<0.000000e+00> : vector<4x64xf32>
    %30 = tpu.matmul %28, %2, %cst_11 {dimension_numbers = #tpu.dot_dimension_numbers<[1], [0], [0], [1], [0, 0, 1, 1], [], []>} : vector<4x16xf32>, vector<16x64xf32>, vector<4x64xf32> -> vector<4x64xf32>
    %31 = arith.addf %29, %30 : vector<4x64xf32>
    %32 = vector.extract_strided_slice %31 {offsets = [0, 0], sizes = [4, 48], strides = [1, 1]} : vector<4x64xf32> to vector<4x48xf32>
    %33 = arith.negf %32 : vector<4x48xf32>
    %34 = math.exp %33 : vector<4x48xf32>
    %cst_12 = arith.constant 1.000000e+00 : f32
    %35 = vector.broadcast %cst_12 : f32 to vector<4x48xf32>
    %36 = arith.addf %35, %34 : vector<4x48xf32>
    %37 = arith.divf %35, %36 : vector<4x48xf32>
    %38 = vector.extract_strided_slice %31 {offsets = [0, 48], sizes = [4, 16], strides = [1, 1]} : vector<4x64xf32> to vector<4x16xf32>
    %39 = math.tanh %38 : vector<4x16xf32>
    %40 = vector.extract_strided_slice %37 {offsets = [0, 16], sizes = [4, 16], strides = [1, 1]} : vector<4x48xf32> to vector<4x16xf32>
    %41 = arith.mulf %40, %25 : vector<4x16xf32>
    %42 = vector.extract_strided_slice %37 {offsets = [0, 0], sizes = [4, 16], strides = [1, 1]} : vector<4x48xf32> to vector<4x16xf32>
    %43 = arith.mulf %42, %39 : vector<4x16xf32>
    %44 = arith.addf %41, %43 : vector<4x16xf32>
    %45 = vector.extract_strided_slice %37 {offsets = [0, 32], sizes = [4, 16], strides = [1, 1]} : vector<4x48xf32> to vector<4x16xf32>
    %46 = math.tanh %44 : vector<4x16xf32>
    %47 = arith.mulf %45, %46 : vector<4x16xf32>
    %48 = vector.extract_strided_slice %7 {offsets = [8, 0], sizes = [4, 64], strides = [1, 1]} : vector<32x64xf32> to vector<4x64xf32>
    %cst_13 = arith.constant dense<0.000000e+00> : vector<4x64xf32>
    %49 = tpu.matmul %47, %2, %cst_13 {dimension_numbers = #tpu.dot_dimension_numbers<[1], [0], [0], [1], [0, 0, 1, 1], [], []>} : vector<4x16xf32>, vector<16x64xf32>, vector<4x64xf32> -> vector<4x64xf32>
    %50 = arith.addf %48, %49 : vector<4x64xf32>
    %51 = vector.extract_strided_slice %50 {offsets = [0, 0], sizes = [4, 48], strides = [1, 1]} : vector<4x64xf32> to vector<4x48xf32>
    %52 = arith.negf %51 : vector<4x48xf32>
    %53 = math.exp %52 : vector<4x48xf32>
    %cst_14 = arith.constant 1.000000e+00 : f32
    %54 = vector.broadcast %cst_14 : f32 to vector<4x48xf32>
    %55 = arith.addf %54, %53 : vector<4x48xf32>
    %56 = arith.divf %54, %55 : vector<4x48xf32>
    %57 = vector.extract_strided_slice %50 {offsets = [0, 48], sizes = [4, 16], strides = [1, 1]} : vector<4x64xf32> to vector<4x16xf32>
    %58 = math.tanh %57 : vector<4x16xf32>
    %59 = vector.extract_strided_slice %56 {offsets = [0, 16], sizes = [4, 16], strides = [1, 1]} : vector<4x48xf32> to vector<4x16xf32>
    %60 = arith.mulf %59, %44 : vector<4x16xf32>
    %61 = vector.extract_strided_slice %56 {offsets = [0, 0], sizes = [4, 16], strides = [1, 1]} : vector<4x48xf32> to vector<4x16xf32>
    %62 = arith.mulf %61, %58 : vector<4x16xf32>
    %63 = arith.addf %60, %62 : vector<4x16xf32>
    %64 = vector.extract_strided_slice %56 {offsets = [0, 32], sizes = [4, 16], strides = [1, 1]} : vector<4x48xf32> to vector<4x16xf32>
    %65 = math.tanh %63 : vector<4x16xf32>
    %66 = arith.mulf %64, %65 : vector<4x16xf32>
    %67 = vector.extract_strided_slice %7 {offsets = [12, 0], sizes = [4, 64], strides = [1, 1]} : vector<32x64xf32> to vector<4x64xf32>
    %cst_15 = arith.constant dense<0.000000e+00> : vector<4x64xf32>
    %68 = tpu.matmul %66, %2, %cst_15 {dimension_numbers = #tpu.dot_dimension_numbers<[1], [0], [0], [1], [0, 0, 1, 1], [], []>} : vector<4x16xf32>, vector<16x64xf32>, vector<4x64xf32> -> vector<4x64xf32>
    %69 = arith.addf %67, %68 : vector<4x64xf32>
    %70 = vector.extract_strided_slice %69 {offsets = [0, 0], sizes = [4, 48], strides = [1, 1]} : vector<4x64xf32> to vector<4x48xf32>
    %71 = arith.negf %70 : vector<4x48xf32>
    %72 = math.exp %71 : vector<4x48xf32>
    %cst_16 = arith.constant 1.000000e+00 : f32
    %73 = vector.broadcast %cst_16 : f32 to vector<4x48xf32>
    %74 = arith.addf %73, %72 : vector<4x48xf32>
    %75 = arith.divf %73, %74 : vector<4x48xf32>
    %76 = vector.extract_strided_slice %69 {offsets = [0, 48], sizes = [4, 16], strides = [1, 1]} : vector<4x64xf32> to vector<4x16xf32>
    %77 = math.tanh %76 : vector<4x16xf32>
    %78 = vector.extract_strided_slice %75 {offsets = [0, 16], sizes = [4, 16], strides = [1, 1]} : vector<4x48xf32> to vector<4x16xf32>
    %79 = arith.mulf %78, %63 : vector<4x16xf32>
    %80 = vector.extract_strided_slice %75 {offsets = [0, 0], sizes = [4, 16], strides = [1, 1]} : vector<4x48xf32> to vector<4x16xf32>
    %81 = arith.mulf %80, %77 : vector<4x16xf32>
    %82 = arith.addf %79, %81 : vector<4x16xf32>
    %83 = vector.extract_strided_slice %75 {offsets = [0, 32], sizes = [4, 16], strides = [1, 1]} : vector<4x48xf32> to vector<4x16xf32>
    %84 = math.tanh %82 : vector<4x16xf32>
    %85 = arith.mulf %83, %84 : vector<4x16xf32>
    %86 = vector.extract_strided_slice %7 {offsets = [16, 0], sizes = [4, 64], strides = [1, 1]} : vector<32x64xf32> to vector<4x64xf32>
    %cst_17 = arith.constant dense<0.000000e+00> : vector<4x64xf32>
    %87 = tpu.matmul %85, %2, %cst_17 {dimension_numbers = #tpu.dot_dimension_numbers<[1], [0], [0], [1], [0, 0, 1, 1], [], []>} : vector<4x16xf32>, vector<16x64xf32>, vector<4x64xf32> -> vector<4x64xf32>
    %88 = arith.addf %86, %87 : vector<4x64xf32>
    %89 = vector.extract_strided_slice %88 {offsets = [0, 0], sizes = [4, 48], strides = [1, 1]} : vector<4x64xf32> to vector<4x48xf32>
    %90 = arith.negf %89 : vector<4x48xf32>
    %91 = math.exp %90 : vector<4x48xf32>
    %cst_18 = arith.constant 1.000000e+00 : f32
    %92 = vector.broadcast %cst_18 : f32 to vector<4x48xf32>
    %93 = arith.addf %92, %91 : vector<4x48xf32>
    %94 = arith.divf %92, %93 : vector<4x48xf32>
    %95 = vector.extract_strided_slice %88 {offsets = [0, 48], sizes = [4, 16], strides = [1, 1]} : vector<4x64xf32> to vector<4x16xf32>
    %96 = math.tanh %95 : vector<4x16xf32>
    %97 = vector.extract_strided_slice %94 {offsets = [0, 16], sizes = [4, 16], strides = [1, 1]} : vector<4x48xf32> to vector<4x16xf32>
    %98 = arith.mulf %97, %82 : vector<4x16xf32>
    %99 = vector.extract_strided_slice %94 {offsets = [0, 0], sizes = [4, 16], strides = [1, 1]} : vector<4x48xf32> to vector<4x16xf32>
    %100 = arith.mulf %99, %96 : vector<4x16xf32>
    %101 = arith.addf %98, %100 : vector<4x16xf32>
    %102 = vector.extract_strided_slice %94 {offsets = [0, 32], sizes = [4, 16], strides = [1, 1]} : vector<4x48xf32> to vector<4x16xf32>
    %103 = math.tanh %101 : vector<4x16xf32>
    %104 = arith.mulf %102, %103 : vector<4x16xf32>
    %105 = vector.extract_strided_slice %7 {offsets = [20, 0], sizes = [4, 64], strides = [1, 1]} : vector<32x64xf32> to vector<4x64xf32>
    %cst_19 = arith.constant dense<0.000000e+00> : vector<4x64xf32>
    %106 = tpu.matmul %104, %2, %cst_19 {dimension_numbers = #tpu.dot_dimension_numbers<[1], [0], [0], [1], [0, 0, 1, 1], [], []>} : vector<4x16xf32>, vector<16x64xf32>, vector<4x64xf32> -> vector<4x64xf32>
    %107 = arith.addf %105, %106 : vector<4x64xf32>
    %108 = vector.extract_strided_slice %107 {offsets = [0, 0], sizes = [4, 48], strides = [1, 1]} : vector<4x64xf32> to vector<4x48xf32>
    %109 = arith.negf %108 : vector<4x48xf32>
    %110 = math.exp %109 : vector<4x48xf32>
    %cst_20 = arith.constant 1.000000e+00 : f32
    %111 = vector.broadcast %cst_20 : f32 to vector<4x48xf32>
    %112 = arith.addf %111, %110 : vector<4x48xf32>
    %113 = arith.divf %111, %112 : vector<4x48xf32>
    %114 = vector.extract_strided_slice %107 {offsets = [0, 48], sizes = [4, 16], strides = [1, 1]} : vector<4x64xf32> to vector<4x16xf32>
    %115 = math.tanh %114 : vector<4x16xf32>
    %116 = vector.extract_strided_slice %113 {offsets = [0, 16], sizes = [4, 16], strides = [1, 1]} : vector<4x48xf32> to vector<4x16xf32>
    %117 = arith.mulf %116, %101 : vector<4x16xf32>
    %118 = vector.extract_strided_slice %113 {offsets = [0, 0], sizes = [4, 16], strides = [1, 1]} : vector<4x48xf32> to vector<4x16xf32>
    %119 = arith.mulf %118, %115 : vector<4x16xf32>
    %120 = arith.addf %117, %119 : vector<4x16xf32>
    %121 = vector.extract_strided_slice %113 {offsets = [0, 32], sizes = [4, 16], strides = [1, 1]} : vector<4x48xf32> to vector<4x16xf32>
    %122 = math.tanh %120 : vector<4x16xf32>
    %123 = arith.mulf %121, %122 : vector<4x16xf32>
    %124 = vector.extract_strided_slice %7 {offsets = [24, 0], sizes = [4, 64], strides = [1, 1]} : vector<32x64xf32> to vector<4x64xf32>
    %cst_21 = arith.constant dense<0.000000e+00> : vector<4x64xf32>
    %125 = tpu.matmul %123, %2, %cst_21 {dimension_numbers = #tpu.dot_dimension_numbers<[1], [0], [0], [1], [0, 0, 1, 1], [], []>} : vector<4x16xf32>, vector<16x64xf32>, vector<4x64xf32> -> vector<4x64xf32>
    %126 = arith.addf %124, %125 : vector<4x64xf32>
    %127 = vector.extract_strided_slice %126 {offsets = [0, 0], sizes = [4, 48], strides = [1, 1]} : vector<4x64xf32> to vector<4x48xf32>
    %128 = arith.negf %127 : vector<4x48xf32>
    %129 = math.exp %128 : vector<4x48xf32>
    %cst_22 = arith.constant 1.000000e+00 : f32
    %130 = vector.broadcast %cst_22 : f32 to vector<4x48xf32>
    %131 = arith.addf %130, %129 : vector<4x48xf32>
    %132 = arith.divf %130, %131 : vector<4x48xf32>
    %133 = vector.extract_strided_slice %126 {offsets = [0, 48], sizes = [4, 16], strides = [1, 1]} : vector<4x64xf32> to vector<4x16xf32>
    %134 = math.tanh %133 : vector<4x16xf32>
    %135 = vector.extract_strided_slice %132 {offsets = [0, 16], sizes = [4, 16], strides = [1, 1]} : vector<4x48xf32> to vector<4x16xf32>
    %136 = arith.mulf %135, %120 : vector<4x16xf32>
    %137 = vector.extract_strided_slice %132 {offsets = [0, 0], sizes = [4, 16], strides = [1, 1]} : vector<4x48xf32> to vector<4x16xf32>
    %138 = arith.mulf %137, %134 : vector<4x16xf32>
    %139 = arith.addf %136, %138 : vector<4x16xf32>
    %140 = vector.extract_strided_slice %132 {offsets = [0, 32], sizes = [4, 16], strides = [1, 1]} : vector<4x48xf32> to vector<4x16xf32>
    %141 = math.tanh %139 : vector<4x16xf32>
    %142 = arith.mulf %140, %141 : vector<4x16xf32>
    %143 = vector.extract_strided_slice %7 {offsets = [28, 0], sizes = [4, 64], strides = [1, 1]} : vector<32x64xf32> to vector<4x64xf32>
    %cst_23 = arith.constant dense<0.000000e+00> : vector<4x64xf32>
    %144 = tpu.matmul %142, %2, %cst_23 {dimension_numbers = #tpu.dot_dimension_numbers<[1], [0], [0], [1], [0, 0, 1, 1], [], []>} : vector<4x16xf32>, vector<16x64xf32>, vector<4x64xf32> -> vector<4x64xf32>
    %145 = arith.addf %143, %144 : vector<4x64xf32>
    %146 = vector.extract_strided_slice %145 {offsets = [0, 0], sizes = [4, 48], strides = [1, 1]} : vector<4x64xf32> to vector<4x48xf32>
    %147 = arith.negf %146 : vector<4x48xf32>
    %148 = math.exp %147 : vector<4x48xf32>
    %cst_24 = arith.constant 1.000000e+00 : f32
    %149 = vector.broadcast %cst_24 : f32 to vector<4x48xf32>
    %150 = arith.addf %149, %148 : vector<4x48xf32>
    %151 = arith.divf %149, %150 : vector<4x48xf32>
    %152 = vector.extract_strided_slice %145 {offsets = [0, 48], sizes = [4, 16], strides = [1, 1]} : vector<4x64xf32> to vector<4x16xf32>
    %153 = math.tanh %152 : vector<4x16xf32>
    %154 = vector.extract_strided_slice %151 {offsets = [0, 16], sizes = [4, 16], strides = [1, 1]} : vector<4x48xf32> to vector<4x16xf32>
    %155 = arith.mulf %154, %139 : vector<4x16xf32>
    %156 = vector.extract_strided_slice %151 {offsets = [0, 0], sizes = [4, 16], strides = [1, 1]} : vector<4x48xf32> to vector<4x16xf32>
    %157 = arith.mulf %156, %153 : vector<4x16xf32>
    %158 = arith.addf %155, %157 : vector<4x16xf32>
    %c2_i32 = arith.constant 2 : i32
    %159 = vector.broadcast %c2_i32 : i32 to vector<4x16xi32>
    %160 = arith.cmpi slt, %0, %159 : vector<4x16xi32>
    %161 = arith.select %160, %158, %139 : vector<4x16xi1>, vector<4x16xf32>
    %162 = vector.extract_strided_slice %161 {offsets = [0, 0], sizes = [2, 16], strides = [1, 1]} : vector<4x16xf32> to vector<2x16xf32>
    %163 = vector.extract_strided_slice %161 {offsets = [2, 0], sizes = [2, 16], strides = [1, 1]} : vector<4x16xf32> to vector<2x16xf32>
    %164 = tpu.concatenate %162, %163 in 1 : vector<2x16xf32>, vector<2x16xf32> -> vector<2x32xf32>
    %c0_25 = arith.constant 0 : index
    %c0_26 = arith.constant 0 : index
    %165 = vector.load %arg4[%c0_25, %c0_26] : memref<32x16xf32, #tpu.memory_space<vmem>>, vector<32x16xf32>
    %cst_27 = arith.constant dense<0.000000e+00> : vector<2x16xf32>
    %166 = tpu.matmul %164, %165, %cst_27 {dimension_numbers = #tpu.dot_dimension_numbers<[1], [0], [0], [1], [0, 0, 1, 1], [], []>} : vector<2x32xf32>, vector<32x16xf32>, vector<2x16xf32> -> vector<2x16xf32>
    %c0_28 = arith.constant 0 : index
    %c0_29 = arith.constant 0 : index
    %167 = vector.load %arg5[%c0_28, %c0_29] : memref<1x16xf32, #tpu.memory_space<vmem>>, vector<1x16xf32>
    %168 = vector.broadcast %167 : vector<1x16xf32> to vector<2x16xf32>
    %169 = arith.addf %166, %168 : vector<2x16xf32>
    %cst_30 = arith.constant 0.000000e+00 : f32
    %170 = vector.broadcast %cst_30 : f32 to vector<2x16xf32>
    %171 = arith.maximumf %169, %170 : vector<2x16xf32>
    %c0_31 = arith.constant 0 : index
    %c0_32 = arith.constant 0 : index
    %172 = vector.load %arg6[%c0_31, %c0_32] : memref<16x3xf32, #tpu.memory_space<vmem>>, vector<16x3xf32>
    %cst_33 = arith.constant dense<0.000000e+00> : vector<2x3xf32>
    %173 = tpu.matmul %171, %172, %cst_33 {dimension_numbers = #tpu.dot_dimension_numbers<[1], [0], [0], [1], [0, 0, 1, 1], [], []>} : vector<2x16xf32>, vector<16x3xf32>, vector<2x3xf32> -> vector<2x3xf32>
    %c0_34 = arith.constant 0 : index
    %c0_35 = arith.constant 0 : index
    %174 = vector.load %arg7[%c0_34, %c0_35] : memref<1x3xf32, #tpu.memory_space<vmem>>, vector<1x3xf32>
    %175 = vector.broadcast %174 : vector<1x3xf32> to vector<2x3xf32>
    %176 = arith.addf %173, %175 : vector<2x3xf32>
    %c0_36 = arith.constant 0 : index
    %c0_37 = arith.constant 0 : index
    %177 = vector.load %arg8[%c0_36, %c0_37] : memref<2x3xf32, #tpu.memory_space<vmem>>, vector<2x3xf32>
    tpu.vector_store %arg8[%c0_36, %c0_37], %176 {strides = array<i32>} : memref<2x3xf32, #tpu.memory_space<vmem>>, vector<2x3xf32>,
    return
  }
}

</mosaic_0001>

<llo_original>
// kernel: _forward_jit.1
$region0: #{_forward_jit.1}
  #allocation0 [shape = 'u32[]', space=smem, size = 0x4, offset = 0x4, fixed_abs, tag = 'smem constant byte address 0x4 - core index']
  #allocation1 [shape = 'u32[72,128]{1,0:T(1,128)}', space=vmem, size = 0x9000, scoped, tag = 'internal scratch']
  %s0 = inlined_call_operand.vmem [shape: f32[32,32], index: 0, kind: input, shape index: {}]
  %s1 = inlined_call_operand.vmem [shape: f32[32,64], index: 1, kind: input, shape index: {}]
  %s2 = inlined_call_operand.vmem [shape: f32[16,64], index: 2, kind: input, shape index: {}]
  %s3 = inlined_call_operand.vmem [shape: f32[1,64], index: 3, kind: input, shape index: {}]
  %s4 = inlined_call_operand.vmem [shape: f32[32,16], index: 4, kind: input, shape index: {}]
  %s5 = inlined_call_operand.vmem [shape: f32[1,16], index: 5, kind: input, shape index: {}]
  %s6 = inlined_call_operand.vmem [shape: f32[16,3], index: 6, kind: input, shape index: {}]
  %s7 = inlined_call_operand.vmem [shape: f32[1,3], index: 7, kind: input, shape index: {}]
  %s8 = inlined_call_operand.hbm [shape: f32[2,3], index: 8, kind: output, shape index: {}]
  %s9 = sld [smem:[#allocation0]]
  $region42: #{_forward_jit.1} parent=0
    _
  %s11 = ssub.s32 1, %s9
  %s12 = scalar_select 0, %s11, %s9
  $region1: #{_forward_jit.1} parent=0
    #allocation2 [shape = 'u8[1024]{0}', space=vmem, size = 0x400, scoped, tag = 'output window, operand 0, single buffered']
    #allocation3 [shape = 's32[1]{0}', space=sflag, size = 0x4, scoped, tag = 'scoped memory for _forward_jit.1']
    %13 = vsyncpa [#allocation3], 0
    // Predicated region
    $region2: #{_forward_jit.1} parent=1 // pred_check
      _
    $region3: #{_forward_jit.1} parent=1 // pred_check_branch
      %15 = sbr.rel (0) target = $region5
    $region4: #{_forward_jit.1} parent=1 // pred_region
      _
    $region5: #{_forward_jit.1} parent=1 // pred_fallthru
      _
    // Predicated region
    $region6: #{_forward_jit.1} parent=1 // pred_check
      _
    $region7: #{_forward_jit.1} parent=1 // pred_check_branch
      %17 = sbr.rel (0) target = $region9
    $region8: #{_forward_jit.1} parent=1 // pred_region
      _
    $region9: #{_forward_jit.1} parent=1 // pred_fallthru
      _
    // Predicated region
    $region10: #{_forward_jit.1} parent=1 // pred_check
      _
    $region11: #{_forward_jit.1} parent=1 // pred_check_branch
      %19 = sbr.rel (0) target = $region13
    $region12: #{_forward_jit.1} parent=1 // pred_region
      _
    $region13: #{_forward_jit.1} parent=1 // pred_fallthru
      _
    // Predicated region
    $region14: #{_forward_jit.1} parent=1 // pred_check
      _
    $region15: #{_forward_jit.1} parent=1 // pred_check_branch
      %21 = sbr.rel (0) target = $region17
    $region16: #{_forward_jit.1} parent=1 // pred_region
      _
    $region17: #{_forward_jit.1} parent=1 // pred_fallthru
      _
    // Predicated region
    $region18: #{_forward_jit.1} parent=1 // pred_check
      _
    $region19: #{_forward_jit.1} parent=1 // pred_check_branch
      %23 = sbr.rel (0) target = $region21
    $region20: #{_forward_jit.1} parent=1 // pred_region
      _
    $region21: #{_forward_jit.1} parent=1 // pred_fallthru
      _
    // Predicated region
    $region22: #{_forward_jit.1} parent=1 // pred_check
      _
    $region23: #{_forward_jit.1} parent=1 // pred_check_branch
      %25 = sbr.rel (0) target = $region25
    $region24: #{_forward_jit.1} parent=1 // pred_region
      _
    $region25: #{_forward_jit.1} parent=1 // pred_fallthru
      _
    // Predicated region
    $region26: #{_forward_jit.1} parent=1 // pred_check
      _
    $region27: #{_forward_jit.1} parent=1 // pred_check_branch
      %27 = sbr.rel (0) target = $region29
    $region28: #{_forward_jit.1} parent=1 // pred_region
      _
    $region29: #{_forward_jit.1} parent=1 // pred_fallthru
      _
    // Predicated region
    $region30: #{_forward_jit.1} parent=1 // pred_check
      _
    $region31: #{_forward_jit.1} parent=1 // pred_check_branch
      %29 = sbr.rel (0) target = $region33
    $region32: #{_forward_jit.1} parent=1 // pred_region
      _
    $region33: #{_forward_jit.1} parent=1 // pred_fallthru
      _
    %v30 = vlaneseq
    %v31 = vshrl.u32 %v30, 7
    %v32 = vld [vmem:[%s0] sm:$0xff]
    %v33 = vld [vmem:[%s0 + $0x8] sm:$0xff]
    %v34 = vld [vmem:[%s0 + $0x10] sm:$0xff]
    %v35 = vld [vmem:[%s0 + $0x18] sm:$0xff]
    %v36 = vld [vmem:[%s2] sm:$0xff]
    %v37 = vld [vmem:[%s2 + $0x8] sm:$0xff]
    %v38 = vld [vmem:[%s1] sm:$0xff]
    %v39 = vld [vmem:[%s1 + $0x8] sm:$0xff]
    %v40 = vld [vmem:[%s1 + $0x10] sm:$0xff]
    %v41 = vld [vmem:[%s1 + $0x18] sm:$0xff]
    %v42 = vld [vmem:[%s3] sm:$0x1]
    %v44 = vperm.slane %v42, 0
    %vm46 = vcmask 261120
    %v48 = vsel %vm46, %v32, 0
    %v51 = vsel %vm46, %v33, 0
    %v54 = vsel %vm46, %v34, 0
    %v57 = vsel %vm46, %v35, 0
    %59 = vmatpush.msra.mxu0 0.0
    %60 = vmatpush.msra.mxu0 0.0
    %61 = vmatpush.msra.mxu0 0.0
    %62 = vmatpush.msra.mxu0 0.0
    %63 = vmatpush.msra.mxu0 0.0
    %64 = vmatpush.msra.mxu0 0.0
    %65 = vmatpush.msra.mxu0 0.0
    %66 = vmatpush.msra.mxu0 0.0
    %67 = vmatpush.msra.mxu0 0.0
    %68 = vmatpush.msra.mxu0 0.0
    %69 = vmatpush.msra.mxu0 0.0
    %70 = vmatpush.msra.mxu0 0.0
    %71 = vmatpush.msra.mxu0 %v41
    %72 = vmatpush.msra.mxu0 %v40
    %73 = vmatpush.msra.mxu0 %v39
    %74 = vmatpush.msra.mxu0 %v38
    %75 = vmatmul.f32.gmra.mxu0 %v48
    %v76 = vpop.f32.mrf.mxu0
    %v77 = vadd.f32 %v44, %v76
    %78 = vmatmul.f32.gmra.mxu0 %v51
    %v79 = vpop.f32.mrf.mxu0
    %v80 = vadd.f32 %v44, %v79
    %81 = vmatmul.f32.gmra.mxu0 %v54
    %v82 = vpop.f32.mrf.mxu0
    %v83 = vadd.f32 %v44, %v82
    %84 = vmatmul.f32.gmra.mxu0 %v57
    %v85 = vpop.f32.mrf.mxu0
    %v86 = vadd.f32 %v44, %v85
    %87 = vdwg.mxu0
    %vm88 = vcmask 130048
    %v90 = vsel %vm88, 0.0, 0
    %92 = vmatpush.msra.mxu0 0.0
    %93 = vmatpush.msra.mxu0 0.0
    %94 = vmatpush.msra.mxu0 0.0
    %95 = vmatpush.msra.mxu0 0.0
    %96 = vmatpush.msra.mxu0 0.0
    %97 = vmatpush.msra.mxu0 0.0
    %98 = vmatpush.msra.mxu0 0.0
    %99 = vmatpush.msra.mxu0 0.0
    %100 = vmatpush.msra.mxu0 0.0
    %101 = vmatpush.msra.mxu0 0.0
    %102 = vmatpush.msra.mxu0 0.0
    %103 = vmatpush.msra.mxu0 0.0
    %104 = vmatpush.msra.mxu0 0.0
    %105 = vmatpush.msra.mxu0 0.0
    %106 = vmatpush.msra.mxu0 %v37
    %107 = vmatpush.msra.mxu0 %v36
    %108 = vmatmul.f32.gmra.mxu0 %v90
    %v109 = vpop.f32.mrf.mxu0
    %v110 = vadd.f32 0.0, %v109
    %111 = vdwg.mxu0
    %v112 = vadd.f32 %v77, %v110
    %v113 = vxor.u32 %v112, 2147483648
    %v114 = vmul.f32 %v113, 1.442695
    %v115 = vpow.pop %v114
    %v116 = vadd.f32 %v115, 1.0
    %v117 = vrcp.pop %v116
    %v118 = vmul.f32 %v116, %v117
    %v119 = vsub.f32 1.0, %v118
    %v120 = vmul.f32 %v117, %v119
    %v121 = vadd.f32 %v117, %v120
    %vm122 = vweird.f32 %v116
    %vm123 = vweird.f32 %v117
    %vm124 = vmor %vm122, %vm123
    %v125 = vsel %vm124, %v117, %v121
    %v126 = vand.u32 2147483647, %v116
    %vm127 = vcmp.eq.f32.partialorder %v126, 8.507059e+37
    %v128 = vand.u32 %v116, 2147483648
    %v129 = vor.u32 1.1754944e-38, %v128
    %v130 = vsel %vm127, %v129, %v125
    %v131 = vmul.f32 1.0, %v130
    %v132 = vtanh.pop %v112
    %v133 = vmul.f32 %v131, 0.0
    %135 = vrot.lane.b32.xlu0 %v132, 80
    %v136 = vpop.permute.xlu0 %135
    %v138 = vmul.f32 %v131, %v136
    %140 = vrot.lane.b32.xlu0 %v138, 16
    %v141 = vpop.permute.xlu0 %140
    %v143 = vadd.f32 %v133, %v141
    %v144 = vtanh.pop %v143
    %146 = vrot.lane.b32.xlu0 %v144, 16
    %v147 = vpop.permute.xlu0 %146
    %v149 = vmul.f32 %v131, %v147
    %151 = vrot.lane.b32.xlu0 %v149, 96
    %v152 = vpop.permute.xlu0 %151
    %v153 = vsel %vm88, %v152, 0
    %155 = vmatpush.msra.mxu0 0.0
    %156 = vmatpush.msra.mxu0 0.0
    %157 = vmatpush.msra.mxu0 0.0
    %158 = vmatpush.msra.mxu0 0.0
    %159 = vmatpush.msra.mxu0 0.0
    %160 = vmatpush.msra.mxu0 0.0
    %161 = vmatpush.msra.mxu0 0.0
    %162 = vmatpush.msra.mxu0 0.0
    %163 = vmatpush.msra.mxu0 0.0
    %164 = vmatpush.msra.mxu0 0.0
    %165 = vmatpush.msra.mxu0 0.0
    %166 = vmatpush.msra.mxu0 0.0
    %167 = vmatpush.msra.mxu0 0.0
    %168 = vmatpush.msra.mxu0 0.0
    %169 = vmatpush.msra.mxu0 %v37
    %170 = vmatpush.msra.mxu0 %v36
    %171 = vmatmul.f32.gmra.mxu0 %v153
    %v172 = vpop.f32.mrf.mxu0
    %v173 = vadd.f32 0.0, %v172
    %174 = vdwg.mxu0
    %v176 = vrot.slane %v173, 4
    %v178 = vadd.f32 %v77, %v176
    %v179 = vxor.u32 %v178, 2147483648
    %v180 = vmul.f32 %v179, 1.442695
    %v181 = vpow.pop %v180
    %v182 = vadd.f32 %v181, 1.0
    %v183 = vrcp.pop %v182
    %v184 = vmul.f32 %v182, %v183
    %v185 = vsub.f32 1.0, %v184
    %v186 = vmul.f32 %v183, %v185
    %v187 = vadd.f32 %v183, %v186
    %vm188 = vweird.f32 %v182
    %vm189 = vweird.f32 %v183
    %vm190 = vmor %vm188, %vm189
    %v191 = vsel %vm190, %v183, %v187
    %v192 = vand.u32 2147483647, %v182
    %vm193 = vcmp.eq.f32.partialorder %v192, 8.507059e+37
    %v194 = vand.u32 %v182, 2147483648
    %v195 = vor.u32 1.1754944e-38, %v194
    %v196 = vsel %vm193, %v195, %v191
    %v197 = vmul.f32 1.0, %v196
    %v198 = vtanh.pop %v178
    %v200 = vrot.slane %v143, 4
    %v202 = vmul.f32 %v197, %v200
    %204 = vrot.lane.b32.xlu0 %v198, 80
    %v205 = vpop.permute.xlu0 %204
    %v207 = vmul.f32 %v197, %v205
    %209 = vrot.lane.b32.xlu0 %v207, 16
    %v210 = vpop.permute.xlu0 %209
    %v212 = vadd.f32 %v202, %v210
    %v213 = vtanh.pop %v212
    %215 = vrot.lane.b32.xlu0 %v213, 16
    %v216 = vpop.permute.xlu0 %215
    %v218 = vmul.f32 %v197, %v216
    %v220 = vrot.slane %v218, 4
    %221 = vrot.lane.b32.xlu0 %v220, 96
    %v222 = vpop.permute.xlu0 %221
    %v223 = vsel %vm88, %v222, 0
    %225 = vmatpush.msra.mxu0 0.0
    %226 = vmatpush.msra.mxu0 0.0
    %227 = vmatpush.msra.mxu0 0.0
    %228 = vmatpush.msra.mxu0 0.0
    %229 = vmatpush.msra.mxu0 0.0
    %230 = vmatpush.msra.mxu0 0.0
    %231 = vmatpush.msra.mxu0 0.0
    %232 = vmatpush.msra.mxu0 0.0
    %233 = vmatpush.msra.mxu0 0.0
    %234 = vmatpush.msra.mxu0 0.0
    %235 = vmatpush.msra.mxu0 0.0
    %236 = vmatpush.msra.mxu0 0.0
    %237 = vmatpush.msra.mxu0 0.0
    %238 = vmatpush.msra.mxu0 0.0
    %239 = vmatpush.msra.mxu0 %v37
    %240 = vmatpush.msra.mxu0 %v36
    %241 = vmatmul.f32.gmra.mxu0 %v223
    %v242 = vpop.f32.mrf.mxu0
    %v243 = vadd.f32 0.0, %v242
    %244 = vdwg.mxu0
    %v245 = vadd.f32 %v80, %v243
    %v246 = vxor.u32 %v245, 2147483648
    %v247 = vmul.f32 %v246, 1.442695
    %v248 = vpow.pop %v247
    %v249 = vadd.f32 %v248, 1.0
    %v250 = vrcp.pop %v249
    %v251 = vmul.f32 %v249, %v250
    %v252 = vsub.f32 1.0, %v251
    %v253 = vmul.f32 %v250, %v252
    %v254 = vadd.f32 %v250, %v253
    %vm255 = vweird.f32 %v249
    %vm256 = vweird.f32 %v250
    %vm257 = vmor %vm255, %vm256
    %v258 = vsel %vm257, %v250, %v254
    %v259 = vand.u32 2147483647, %v249
    %vm260 = vcmp.eq.f32.partialorder %v259, 8.507059e+37
    %v261 = vand.u32 %v249, 2147483648
    %v262 = vor.u32 1.1754944e-38, %v261
    %v263 = vsel %vm260, %v262, %v258
    %v264 = vmul.f32 1.0, %v263
    %v265 = vtanh.pop %v245
    %v267 = vrot.slane %v212, 4
    %v269 = vmul.f32 %v264, %v267
    %271 = vrot.lane.b32.xlu0 %v265, 80
    %v272 = vpop.permute.xlu0 %271
    %v274 = vmul.f32 %v264, %v272
    %276 = vrot.lane.b32.xlu0 %v274, 16
    %v277 = vpop.permute.xlu0 %276
    %v279 = vadd.f32 %v269, %v277
    %v280 = vtanh.pop %v279
    %282 = vrot.lane.b32.xlu0 %v280, 16
    %v283 = vpop.permute.xlu0 %282
    %v285 = vmul.f32 %v264, %v283
    %287 = vrot.lane.b32.xlu0 %v285, 96
    %v288 = vpop.permute.xlu0 %287
    %v289 = vsel %vm88, %v288, 0
    %291 = vmatpush.msra.mxu0 0.0
    %292 = vmatpush.msra.mxu0 0.0
    %293 = vmatpush.msra.mxu0 0.0
    %294 = vmatpush.msra.mxu0 0.0
    %295 = vmatpush.msra.mxu0 0.0
    %296 = vmatpush.msra.mxu0 0.0
    %297 = vmatpush.msra.mxu0 0.0
    %298 = vmatpush.msra.mxu0 0.0
    %299 = vmatpush.msra.mxu0 0.0
    %300 = vmatpush.msra.mxu0 0.0
    %301 = vmatpush.msra.mxu0 0.0
    %302 = vmatpush.msra.mxu0 0.0
    %303 = vmatpush.msra.mxu0 0.0
    %304 = vmatpush.msra.mxu0 0.0
    %305 = vmatpush.msra.mxu0 %v37
    %306 = vmatpush.msra.mxu0 %v36
    %307 = vmatmul.f32.gmra.mxu0 %v289
    %v308 = vpop.f32.mrf.mxu0
    %v309 = vadd.f32 0.0, %v308
    %310 = vdwg.mxu0
    %v312 = vrot.slane %v309, 4
    %v314 = vadd.f32 %v80, %v312
    %v315 = vxor.u32 %v314, 2147483648
    %v316 = vmul.f32 %v315, 1.442695
    %v317 = vpow.pop %v316
    %v318 = vadd.f32 %v317, 1.0
    %v319 = vrcp.pop %v318
    %v320 = vmul.f32 %v318, %v319
    %v321 = vsub.f32 1.0, %v320
    %v322 = vmul.f32 %v319, %v321
    %v323 = vadd.f32 %v319, %v322
    %vm324 = vweird.f32 %v318
    %vm325 = vweird.f32 %v319
    %vm326 = vmor %vm324, %vm325
    %v327 = vsel %vm326, %v319, %v323
    %v328 = vand.u32 2147483647, %v318
    %vm329 = vcmp.eq.f32.partialorder %v328, 8.507059e+37
    %v330 = vand.u32 %v318, 2147483648
    %v331 = vor.u32 1.1754944e-38, %v330
    %v332 = vsel %vm329, %v331, %v327
    %v333 = vmul.f32 1.0, %v332
    %v334 = vtanh.pop %v314
    %v336 = vrot.slane %v279, 4
    %v338 = vmul.f32 %v333, %v336
    %340 = vrot.lane.b32.xlu0 %v334, 80
    %v341 = vpop.permute.xlu0 %340
    %v343 = vmul.f32 %v333, %v341
    %345 = vrot.lane.b32.xlu0 %v343, 16
    %v346 = vpop.permute.xlu0 %345
    %v348 = vadd.f32 %v338, %v346
    %v349 = vtanh.pop %v348
    %351 = vrot.lane.b32.xlu0 %v349, 16
    %v352 = vpop.permute.xlu0 %351
    %v354 = vmul.f32 %v333, %v352
    %v356 = vrot.slane %v354, 4
    %357 = vrot.lane.b32.xlu0 %v356, 96
    %v358 = vpop.permute.xlu0 %357
    %v359 = vsel %vm88, %v358, 0
    %361 = vmatpush.msra.mxu0 0.0
    %362 = vmatpush.msra.mxu0 0.0
    %363 = vmatpush.msra.mxu0 0.0
    %364 = vmatpush.msra.mxu0 0.0
    %365 = vmatpush.msra.mxu0 0.0
    %366 = vmatpush.msra.mxu0 0.0
    %367 = vmatpush.msra.mxu0 0.0
    %368 = vmatpush.msra.mxu0 0.0
    %369 = vmatpush.msra.mxu0 0.0
    %370 = vmatpush.msra.mxu0 0.0
    %371 = vmatpush.msra.mxu0 0.0
    %372 = vmatpush.msra.mxu0 0.0
    %373 = vmatpush.msra.mxu0 0.0
    %374 = vmatpush.msra.mxu0 0.0
    %375 = vmatpush.msra.mxu0 %v37
    %376 = vmatpush.msra.mxu0 %v36
    %377 = vmatmul.f32.gmra.mxu0 %v359
    %v378 = vpop.f32.mrf.mxu0
    %v379 = vadd.f32 0.0, %v378
    %380 = vdwg.mxu0
    %v381 = vadd.f32 %v83, %v379
    %v382 = vxor.u32 %v381, 2147483648
    %v383 = vmul.f32 %v382, 1.442695
    %v384 = vpow.pop %v383
    %v385 = vadd.f32 %v384, 1.0
    %v386 = vrcp.pop %v385
    %v387 = vmul.f32 %v385, %v386
    %v388 = vsub.f32 1.0, %v387
    %v389 = vmul.f32 %v386, %v388
    %v390 = vadd.f32 %v386, %v389
    %vm391 = vweird.f32 %v385
    %vm392 = vweird.f32 %v386
    %vm393 = vmor %vm391, %vm392
    %v394 = vsel %vm393, %v386, %v390
    %v395 = vand.u32 2147483647, %v385
    %vm396 = vcmp.eq.f32.partialorder %v395, 8.507059e+37
    %v397 = vand.u32 %v385, 2147483648
    %v398 = vor.u32 1.1754944e-38, %v397
    %v399 = vsel %vm396, %v398, %v394
    %v400 = vmul.f32 1.0, %v399
    %v401 = vtanh.pop %v381
    %v403 = vrot.slane %v348, 4
    %v405 = vmul.f32 %v400, %v403
    %407 = vrot.lane.b32.xlu0 %v401, 80
    %v408 = vpop.permute.xlu0 %407
    %v410 = vmul.f32 %v400, %v408
    %412 = vrot.lane.b32.xlu0 %v410, 16
    %v413 = vpop.permute.xlu0 %412
    %v415 = vadd.f32 %v405, %v413
    %v416 = vtanh.pop %v415
    %418 = vrot.lane.b32.xlu0 %v416, 16
    %v419 = vpop.permute.xlu0 %418
    %v421 = vmul.f32 %v400, %v419
    %423 = vrot.lane.b32.xlu0 %v421, 96
    %v424 = vpop.permute.xlu0 %423
    %v425 = vsel %vm88, %v424, 0
    %427 = vmatpush.msra.mxu0 0.0
    %428 = vmatpush.msra.mxu0 0.0
    %429 = vmatpush.msra.mxu0 0.0
    %430 = vmatpush.msra.mxu0 0.0
    %431 = vmatpush.msra.mxu0 0.0
    %432 = vmatpush.msra.mxu0 0.0
    %433 = vmatpush.msra.mxu0 0.0
    %434 = vmatpush.msra.mxu0 0.0
    %435 = vmatpush.msra.mxu0 0.0
    %436 = vmatpush.msra.mxu0 0.0
    %437 = vmatpush.msra.mxu0 0.0
    %438 = vmatpush.msra.mxu0 0.0
    %439 = vmatpush.msra.mxu0 0.0
    %440 = vmatpush.msra.mxu0 0.0
    %441 = vmatpush.msra.mxu0 %v37
    %442 = vmatpush.msra.mxu0 %v36
    %443 = vmatmul.f32.gmra.mxu0 %v425
    %v444 = vpop.f32.mrf.mxu0
    %v445 = vadd.f32 0.0, %v444
    %446 = vdwg.mxu0
    %v448 = vrot.slane %v445, 4
    %v450 = vadd.f32 %v83, %v448
    %v451 = vxor.u32 %v450, 2147483648
    %v452 = vmul.f32 %v451, 1.442695
    %v453 = vpow.pop %v452
    %v454 = vadd.f32 %v453, 1.0
    %v455 = vrcp.pop %v454
    %v456 = vmul.f32 %v454, %v455
    %v457 = vsub.f32 1.0, %v456
    %v458 = vmul.f32 %v455, %v457
    %v459 = vadd.f32 %v455, %v458
    %vm460 = vweird.f32 %v454
    %vm461 = vweird.f32 %v455
    %vm462 = vmor %vm460, %vm461
    %v463 = vsel %vm462, %v455, %v459
    %v464 = vand.u32 2147483647, %v454
    %vm465 = vcmp.eq.f32.partialorder %v464, 8.507059e+37
    %v466 = vand.u32 %v454, 2147483648
    %v467 = vor.u32 1.1754944e-38, %v466
    %v468 = vsel %vm465, %v467, %v463
    %v469 = vmul.f32 1.0, %v468
    %v470 = vtanh.pop %v450
    %v472 = vrot.slane %v415, 4
    %v474 = vmul.f32 %v469, %v472
    %476 = vrot.lane.b32.xlu0 %v470, 80
    %v477 = vpop.permute.xlu0 %476
    %v479 = vmul.f32 %v469, %v477
    %481 = vrot.lane.b32.xlu0 %v479, 16
    %v482 = vpop.permute.xlu0 %481
    %v484 = vadd.f32 %v474, %v482
    %v485 = vtanh.pop %v484
    %487 = vrot.lane.b32.xlu0 %v485, 16
    %v488 = vpop.permute.xlu0 %487
    %v490 = vmul.f32 %v469, %v488
    %v492 = vrot.slane %v490, 4
    %493 = vrot.lane.b32.xlu0 %v492, 96
    %v494 = vpop.permute.xlu0 %493
    %v495 = vsel %vm88, %v494, 0
    %497 = vmatpush.msra.mxu0 0.0
    %498 = vmatpush.msra.mxu0 0.0
    %499 = vmatpush.msra.mxu0 0.0
    %500 = vmatpush.msra.mxu0 0.0
    %501 = vmatpush.msra.mxu0 0.0
    %502 = vmatpush.msra.mxu0 0.0
    %503 = vmatpush.msra.mxu0 0.0
    %504 = vmatpush.msra.mxu0 0.0
    %505 = vmatpush.msra.mxu0 0.0
    %506 = vmatpush.msra.mxu0 0.0
    %507 = vmatpush.msra.mxu0 0.0
    %508 = vmatpush.msra.mxu0 0.0
    %509 = vmatpush.msra.mxu0 0.0
    %510 = vmatpush.msra.mxu0 0.0
    %511 = vmatpush.msra.mxu0 %v37
    %512 = vmatpush.msra.mxu0 %v36
    %513 = vmatmul.f32.gmra.mxu0 %v495
    %v514 = vpop.f32.mrf.mxu0
    %v515 = vadd.f32 0.0, %v514
    %516 = vdwg.mxu0
    %v517 = vadd.f32 %v86, %v515
    %v518 = vxor.u32 %v517, 2147483648
    %v519 = vmul.f32 %v518, 1.442695
    %v520 = vpow.pop %v519
    %v521 = vadd.f32 %v520, 1.0
    %v522 = vrcp.pop %v521
    %v523 = vmul.f32 %v521, %v522
    %v524 = vsub.f32 1.0, %v523
    %v525 = vmul.f32 %v522, %v524
    %v526 = vadd.f32 %v522, %v525
    %vm527 = vweird.f32 %v521
    %vm528 = vweird.f32 %v522
    %vm529 = vmor %vm527, %vm528
    %v530 = vsel %vm529, %v522, %v526
    %v531 = vand.u32 2147483647, %v521
    %vm532 = vcmp.eq.f32.partialorder %v531, 8.507059e+37
    %v533 = vand.u32 %v521, 2147483648
    %v534 = vor.u32 1.1754944e-38, %v533
    %v535 = vsel %vm532, %v534, %v530
    %v536 = vmul.f32 1.0, %v535
    %v537 = vtanh.pop %v517
    %v539 = vrot.slane %v484, 4
    %v541 = vmul.f32 %v536, %v539
    %543 = vrot.lane.b32.xlu0 %v537, 80
    %v544 = vpop.permute.xlu0 %543
    %v546 = vmul.f32 %v536, %v544
    %548 = vrot.lane.b32.xlu0 %v546, 16
    %v549 = vpop.permute.xlu0 %548
    %v551 = vadd.f32 %v541, %v549
    %v552 = vtanh.pop %v551
    %554 = vrot.lane.b32.xlu0 %v552, 16
    %v555 = vpop.permute.xlu0 %554
    %v557 = vmul.f32 %v536, %v555
    %559 = vrot.lane.b32.xlu0 %v557, 96
    %v560 = vpop.permute.xlu0 %559
    %v561 = vsel %vm88, %v560, 0
    %563 = vmatpush.msra.mxu0 0.0
    %564 = vmatpush.msra.mxu0 0.0
    %565 = vmatpush.msra.mxu0 0.0
    %566 = vmatpush.msra.mxu0 0.0
    %567 = vmatpush.msra.mxu0 0.0
    %568 = vmatpush.msra.mxu0 0.0
    %569 = vmatpush.msra.mxu0 0.0
    %570 = vmatpush.msra.mxu0 0.0
    %571 = vmatpush.msra.mxu0 0.0
    %572 = vmatpush.msra.mxu0 0.0
    %573 = vmatpush.msra.mxu0 0.0
    %574 = vmatpush.msra.mxu0 0.0
    %575 = vmatpush.msra.mxu0 0.0
    %576 = vmatpush.msra.mxu0 0.0
    %577 = vmatpush.msra.mxu0 %v37
    %578 = vmatpush.msra.mxu0 %v36
    %579 = vmatmul.f32.gmra.mxu0 %v561
    %v580 = vpop.f32.mrf.mxu0
    %v581 = vadd.f32 0.0, %v580
    %582 = vdwg.mxu0
    %v584 = vrot.slane %v581, 4
    %v586 = vadd.f32 %v86, %v584
    %v587 = vxor.u32 %v586, 2147483648
    %v588 = vmul.f32 %v587, 1.442695
    %v589 = vpow.pop %v588
    %v590 = vadd.f32 %v589, 1.0
    %v591 = vrcp.pop %v590
    %v592 = vmul.f32 %v590, %v591
    %v593 = vsub.f32 1.0, %v592
    %v594 = vmul.f32 %v591, %v593
    %v595 = vadd.f32 %v591, %v594
    %vm596 = vweird.f32 %v590
    %vm597 = vweird.f32 %v591
    %vm598 = vmor %vm596, %vm597
    %v599 = vsel %vm598, %v591, %v595
    %v600 = vand.u32 2147483647, %v590
    %vm601 = vcmp.eq.f32.partialorder %v600, 8.507059e+37
    %v602 = vand.u32 %v590, 2147483648
    %v603 = vor.u32 1.1754944e-38, %v602
    %v604 = vsel %vm601, %v603, %v599
    %v605 = vmul.f32 1.0, %v604
    %v606 = vtanh.pop %v586
    %v608 = vrot.slane %v551, 4
    %v610 = vmul.f32 %v605, %v608
    %612 = vrot.lane.b32.xlu0 %v606, 80
    %v613 = vpop.permute.xlu0 %612
    %v615 = vmul.f32 %v605, %v613
    %617 = vrot.lane.b32.xlu0 %v615, 16
    %v618 = vpop.permute.xlu0 %617
    %v620 = vadd.f32 %v610, %v618
    %vm621 = vcmp.lt.s32.totalorder %v31, 2
    %v623 = vrot.slane %v620, 4
    %624 = vrot.lane.b32.xlu0 %v623, 112
    %v625 = vpop.permute.xlu0 %624
    %627 = vrot.lane.b32.xlu0 %v551, 112
    %v628 = vpop.permute.xlu0 %627
    %v630 = vsel %vm621, %v625, %v628
    %v632 = vrot.slane %v630, 2
    %633 = vrot.lane.b32.xlu0 %v632, 16
    %v634 = vpop.permute.xlu0 %633
    %v636 = vsel %vm88, %v630, %v634
    %v637 = vld [vmem:[%s4] sm:$0xff]
    %v638 = vld [vmem:[%s4 + $0x8] sm:$0xff]
    %v639 = vld [vmem:[%s4 + $0x10] sm:$0xff]
    %v640 = vld [vmem:[%s4 + $0x18] sm:$0xff]
    %v641 = vld [vmem:[%s5] sm:$0x1]
    %v643 = vperm.slane %v641, 0
    %v646 = vsel %vm46, %v636, 0
    %648 = vmatpush.msra.mxu0 0.0
    %649 = vmatpush.msra.mxu0 0.0
    %650 = vmatpush.msra.mxu0 0.0
    %651 = vmatpush.msra.mxu0 0.0
    %652 = vmatpush.msra.mxu0 0.0
    %653 = vmatpush.msra.mxu0 0.0
    %654 = vmatpush.msra.mxu0 0.0
    %655 = vmatpush.msra.mxu0 0.0
    %656 = vmatpush.msra.mxu0 0.0
    %657 = vmatpush.msra.mxu0 0.0
    %658 = vmatpush.msra.mxu0 0.0
    %659 = vmatpush.msra.mxu0 0.0
    %660 = vmatpush.msra.mxu0 %v640
    %661 = vmatpush.msra.mxu0 %v639
    %662 = vmatpush.msra.mxu0 %v638
    %663 = vmatpush.msra.mxu0 %v637
    %664 = vmatmul.f32.gmra.mxu0 %v646
    %v665 = vpop.f32.mrf.mxu0
    %v666 = vadd.f32 %v643, %v665
    %667 = vdwg.mxu0
    %v668 = vmax.f32 %v666, 0.0
    %v669 = vld [vmem:[%s6] sm:$0xff]
    %v670 = vld [vmem:[%s6 + $0x8] sm:$0xff]
    %v671 = vld [vmem:[%s7] sm:$0x1]
    %v673 = vperm.slane %v671, 0
    %v676 = vsel %vm88, %v668, 0
    %678 = vmatpush.msra.mxu0 0.0
    %679 = vmatpush.msra.mxu0 0.0
    %680 = vmatpush.msra.mxu0 0.0
    %681 = vmatpush.msra.mxu0 0.0
    %682 = vmatpush.msra.mxu0 0.0
    %683 = vmatpush.msra.mxu0 0.0
    %684 = vmatpush.msra.mxu0 0.0
    %685 = vmatpush.msra.mxu0 0.0
    %686 = vmatpush.msra.mxu0 0.0
    %687 = vmatpush.msra.mxu0 0.0
    %688 = vmatpush.msra.mxu0 0.0
    %689 = vmatpush.msra.mxu0 0.0
    %690 = vmatpush.msra.mxu0 0.0
    %691 = vmatpush.msra.mxu0 0.0
    %692 = vmatpush.msra.mxu0 %v670
    %693 = vmatpush.msra.mxu0 %v669
    %694 = vmatmul.f32.gmra.mxu0 %v676
    %v695 = vpop.f32.mrf.mxu0
    %v696 = vadd.f32 %v673, %v695
    %697 = vdwg.mxu0
    %vm698 = vcmask 17408
    %699 = vst.msk [vmem:[#allocation2] sm:$0x3] %vm698, %v696
    // Predicated region
    $region34: #{_forward_jit.1} parent=1 // pred_check
      _
    $region35: #{_forward_jit.1} parent=1 // pred_check_branch
      %701 = sbr.rel (0) target = $region37
    $region36: #{_forward_jit.1} parent=1 // pred_region
      %703 = vsyncadd [#allocation3], 0
      %s705 = sshll.u32 [#allocation2], 4
      %s706 = int_to_ptr.vmem [resolvable:$true] %s705
      %s707 = sshll.u32 %s8, 4
      %s708 = int_to_ptr.hbm [resolvable:$true] %s707
      %710 = dma.vmem_to_hbm [thread:$0]  %s706, 32, %s708, [#allocation3]
    $region37: #{_forward_jit.1} parent=1 // pred_fallthru
      _
    // Predicated region
    $region38: #{_forward_jit.1} parent=1 // pred_check
      _
    $region39: #{_forward_jit.1} parent=1 // pred_check_branch
      %712 = sbr.rel (0) target = $region41
    $region40: #{_forward_jit.1} parent=1 // pred_region
      %714 = dma.done [#allocation3], 32
    $region41: #{_forward_jit.1} parent=1 // pred_fallthru
      _
    %715 = vsyncpa [#allocation3], 1

</llo_original>
